<compile_context>
chip_gen: v5e
topology: v5e:2x2
jax: 0.10.0
libtpu: 0.0.40
codegen_flags: <defaults>
</compile_context>

<pallas_src>
import math

import jax
import jax.numpy as jnp
from jax.experimental import pallas as pl
from jax.experimental.pallas import tpu as pltpu


_VPU_MAX_TILE_ROWS = 2048          # rows of 128 lanes per grid step (VPU path)
_MXU_MAX_TILE_HW = 4096            # lanes per grid step (MXU path)


def _vmem_limits():
    """Generation-dependent VMEM limit and per-block tiling budget (bytes)."""
    cap = 64 * 1024 * 1024
    try:
        info = pltpu.get_tpu_info()
        cap = int(getattr(info, "vmem_capacity_bytes", cap))
    except Exception:
        pass
    if cap >= 128 * 1024 * 1024:        # v5e / v6e (128 MiB physical)
        limit = 96 * 1024 * 1024
    else:                               # v7x (64 MiB physical) or unknown
        limit = 48 * 1024 * 1024
    return limit, (limit * 3) // 4      # leave headroom for weights/scratch


def _make_vpu_kernel(c_in, c_out):
    """Per-tile VPU kernel: o[co] = sum_ci w[co,ci] * x[ci] + b[co] on dense tiles."""

    def kernel(w_ref, b_ref, x_ref, o_ref):
        # w_ref: SMEM (c_out, c_in) f32 ; b_ref: SMEM (c_out,) f32
        # x_ref: VMEM (c_in, t_rows, 128) ; o_ref: VMEM (c_out, t_rows, 128)
        # Hoist channel loads: c_in dense loads per tile, reused for all c_out.
        rows = [x_ref[ci].astype(jnp.float32) for ci in range(c_in)]
        for co in range(c_out):
            acc = rows[0] * w_ref[co, 0]
            for ci in range(1, c_in):
                acc = acc + rows[ci] * w_ref[co, ci]
            o_ref[co] = (acc + b_ref[co]).astype(o_ref.dtype)

    return kernel


def _mxu_kernel(w_ref, b_ref, x_ref, o_ref):
    # w_ref: VMEM (c_out, c_in) resident ; b_ref: VMEM (c_out, 1)
    # x_ref: VMEM (c_in, t_hw)           ; o_ref: VMEM (c_out, t_hw)
    acc = jnp.dot(w_ref[...], x_ref[...], preferred_element_type=jnp.float32)
    o_ref[...] = (acc + b_ref[...]).astype(o_ref.dtype)


def _pick_tile_rows(n_rows, c_in, c_out, in_isz, out_isz, block_budget, n_batch,
                    max_rows):
    """Largest legal rows-per-step tile (mult of 16 or full), keeping >=2 grid steps."""
    bytes_per_row = 2 * 128 * (c_in * in_isz + c_out * out_isz)   # double-buffered
    budget_rows = max(16, block_budget // bytes_per_row)
    t = min(n_rows, max_rows, budget_rows)
    if t < n_rows:
        t = max(16, (t // 16) * 16)          # mult of 16: dense for f32 & bf16
    # v7x has 2 TensorCores sharing the "parallel" grid axes: avoid a 1-step grid.
    if n_batch * pl.cdiv(n_rows, t) < 2 and n_rows >= 32:
        t = max(16, ((n_rows // 2) // 16) * 16)
    return t


def _pick_tile_hw(hw, c_in, c_out, in_isz, out_isz, block_budget, max_hw):
    """Largest legal lane tile for the MXU path (mult of 512 or full HW)."""
    bytes_per_lane = 2 * (c_in * in_isz + c_out * out_isz)        # double-buffered
    budget = max(512, block_budget // bytes_per_lane)
    t = min(hw, max_hw, budget)
    if t < hw:
        t = max(512, (t // 512) * 512)
    return t


def outconv_pallas(x_nchw, weight, bias, *, input_dtype=None, out_dtype=None):
    """1x1 conv (== OutConv.forward).

    x: (N, C_in, H, W), weight: (C_out, C_in, 1, 1), bias: (C_out,).
    input_dtype: optional (e.g. jnp.bfloat16) to halve the HBM input stream;
                 accumulation is always f32 in-kernel.
    out_dtype:   defaults to x's dtype (so f32 in -> f32 out even with a bf16
                 input stream).
    """
    N, C_in, H, W = x_nchw.shape
    C_out = weight.shape[0]
    HW = H * W
    if out_dtype is None:
        out_dtype = x_nchw.dtype

    w_mat = weight.reshape(C_out, C_in)
    x_rows = x_nchw.reshape(N, C_in, HW)                 # free reshape
    if input_dtype is not None:
        x_rows = x_rows.astype(input_dtype)
        w_mat = w_mat.astype(input_dtype)                # bf16 MXU operands

    in_isz = jnp.dtype(x_rows.dtype).itemsize
    out_isz = jnp.dtype(out_dtype).itemsize
    vmem_limit, block_budget = _vmem_limits()

    cost = pl.CostEstimate(
        flops=2 * N * HW * C_in * C_out,
        transcendentals=0,
        bytes_accessed=N * HW * (C_in * in_isz + C_out * out_isz)
        + C_out * (C_in + 1) * 4,
    )
    compiler_params = pltpu.CompilerParams(
        dimension_semantics=("parallel", "parallel"),
        vmem_limit_bytes=vmem_limit,
    )

    small = (C_in <= 16) and (C_out <= 16) and (C_in * C_out <= 128)

    if small:
        # ---------------- VPU path: dense (C, t_rows, 128) blocks ----------
        R = pl.cdiv(HW, 128)
        HW_pad = R * 128
        if HW_pad != HW:
            x_rows = jnp.pad(x_rows, ((0, 0), (0, 0), (0, HW_pad - HW)))
        x_blk = x_rows.reshape(N, C_in, R, 128)          # free if HW % 128 == 0

        t_rows = _pick_tile_rows(R, C_in, C_out, in_isz, out_isz,
                                 block_budget, N, _VPU_MAX_TILE_ROWS)
        grid = (N, pl.cdiv(R, t_rows))

        in_specs = [
            pl.BlockSpec(memory_space=pltpu.MemorySpace.SMEM),   # weights (scalars)
            pl.BlockSpec(memory_space=pltpu.MemorySpace.SMEM),   # bias (scalars)
            pl.BlockSpec((None, C_in, t_rows, 128), lambda n, j: (n, 0, j, 0)),
        ]
        out_spec = pl.BlockSpec((None, C_out, t_rows, 128),
                                lambda n, j: (n, 0, j, 0))

        out_blk = pl.pallas_call(
            _make_vpu_kernel(C_in, C_out),
            out_shape=jax.ShapeDtypeStruct((N, C_out, R, 128), out_dtype),
            grid_spec=pltpu.PrefetchScalarGridSpec(
                num_scalar_prefetch=0, grid=grid,
                in_specs=in_specs, out_specs=out_spec),
            compiler_params=compiler_params,
            cost_estimate=cost,
        )(w_mat.astype(jnp.float32), bias.astype(jnp.float32), x_blk)

        out_rows = out_blk.reshape(N, C_out, HW_pad)
        if HW_pad != HW:
            out_rows = out_rows[:, :, :HW]
        return out_rows.reshape(N, C_out, H, W)

    # ---------------- MXU path: resident W, lane-dense (C, t_hw) blocks ----
    t_hw = _pick_tile_hw(HW, C_in, C_out, in_isz, out_isz,
                         block_budget, _MXU_MAX_TILE_HW)
    grid = (N, pl.cdiv(HW, t_hw))

    in_specs = [
        pl.BlockSpec((C_out, C_in), lambda n, j: (0, 0)),         # resident weights
        pl.BlockSpec((C_out, 1), lambda n, j: (0, 0)),            # bias column
        pl.BlockSpec((None, C_in, t_hw), lambda n, j: (n, 0, j)),
    ]
    out_spec = pl.BlockSpec((None, C_out, t_hw), lambda n, j: (n, 0, j))

    out_rows = pl.pallas_call(
        _mxu_kernel,
        out_shape=jax.ShapeDtypeStruct((N, C_out, HW), out_dtype),
        grid_spec=pltpu.PrefetchScalarGridSpec(
            num_scalar_prefetch=0, grid=grid,
            in_specs=in_specs, out_specs=out_spec),
        compiler_params=compiler_params,
        cost_estimate=cost,
    )(w_mat, bias.astype(jnp.float32).reshape(C_out, 1), x_rows)

    return out_rows.reshape(N, C_out, H, W)


def init_outconv_params(key, in_dim, out_dim, dtype=jnp.float32):
    """Deterministic init matching nn.Conv2d defaults (kaiming_uniform-ish bounds)."""
    kw, kb = jax.random.split(key)
    fan_in = in_dim * 1 * 1
    bound_w = math.sqrt(1.0 / fan_in) * math.sqrt(3.0)   # kaiming_uniform(a=sqrt(5))
    weight = jax.random.uniform(kw, (out_dim, in_dim, 1, 1), dtype,
                                minval=-bound_w, maxval=bound_w)
    bound_b = 1.0 / math.sqrt(fan_in)
    bias = jax.random.uniform(kb, (out_dim,), dtype, minval=-bound_b, maxval=bound_b)
    return weight, bias


if __name__ == "__main__":
    key = jax.random.PRNGKey(0)
    k_x, k_p, k_x2, k_p2 = jax.random.split(key, 4)

    # --- OutConv case (small channels -> VPU path), exact f32 check ---------
    N, C_in, H, W = 2, 4, 16, 16
    C_out = 3
    x = jax.random.normal(k_x, (N, C_in, H, W), jnp.float32)
    weight, bias = init_outconv_params(k_p, C_in, C_out)

    out = jax.block_until_ready(outconv_pallas(x, weight, bias))
    ref = jnp.einsum("nchw,oc->nohw", x, weight.reshape(C_out, C_in)) \
        + bias[None, :, None, None]
    assert out.shape == (N, C_out, H, W)
    assert jnp.allclose(out, ref, atol=1e-5, rtol=1e-5)

    # --- Large-channel case (MXU path) sanity check --------------------------
    N2, C_in2, H2, W2, C_out2 = 2, 64, 8, 8, 32
    x2 = jax.random.normal(k_x2, (N2, C_in2, H2, W2), jnp.float32)
    weight2, bias2 = init_outconv_params(k_p2, C_in2, C_out2)
    out2 = jax.block_until_ready(outconv_pallas(x2, weight2, bias2))
    ref2 = jnp.einsum("nchw,oc->nohw", x2, weight2.reshape(C_out2, C_in2),
                      precision="highest") + bias2[None, :, None, None]
    assert out2.shape == (N2, C_out2, H2, W2)
    assert jnp.allclose(out2, ref2, atol=2e-2, rtol=2e-2)

    print("KERNEL_OK")
</pallas_src>

<mosaic_0001>
module attributes {stable_mosaic.version = 11 : i64} {
  func.func @kernel(%arg0: i32, %arg1: i32, %arg2: memref<3x4xf32, #tpu.memory_space<smem>>, %arg3: memref<3xf32, #tpu.memory_space<smem>>, %arg4: memref<1x4x2x128xf32, #tpu.memory_space<vmem>>, %arg5: memref<1x3x2x128xf32, #tpu.memory_space<vmem>>) attributes {dimension_semantics = [#tpu.dimension_semantics<parallel>, #tpu.dimension_semantics<parallel>], iteration_bounds = array<i64: 2, 1>, scalar_prefetch = 0 : i64, scratch_operands = 0 : i64, tpu.core_type = #tpu.core_type<tc>, window_params = [{transform_indices = @transform_0, window_bounds = array<i64: 3, 4>}, {transform_indices = @transform_1, window_bounds = array<i64: 3>}, {transform_indices = @transform_2, window_bounds = array<i64: 1, 4, 2, 128>}, {transform_indices = @transform_3, window_bounds = array<i64: 1, 3, 2, 128>}]} {
    %c0 = arith.constant 0 : index
    %c0_0 = arith.constant 0 : index
    %c0_1 = arith.constant 0 : index
    %c0_2 = arith.constant 0 : index
    %0 = vector.load %arg4[%c0, %c0_0, %c0_1, %c0_2] : memref<1x4x2x128xf32, #tpu.memory_space<vmem>>, vector<1x1x2x128xf32>
    %1 = vector.shape_cast %0 : vector<1x1x2x128xf32> to vector<2x128xf32>
    %c0_3 = arith.constant 0 : index
    %c1 = arith.constant 1 : index
    %c0_4 = arith.constant 0 : index
    %c0_5 = arith.constant 0 : index
    %2 = vector.load %arg4[%c0_3, %c1, %c0_4, %c0_5] : memref<1x4x2x128xf32, #tpu.memory_space<vmem>>, vector<1x1x2x128xf32>
    %3 = vector.shape_cast %2 : vector<1x1x2x128xf32> to vector<2x128xf32>
    %c0_6 = arith.constant 0 : index
    %c2 = arith.constant 2 : index
    %c0_7 = arith.constant 0 : index
    %c0_8 = arith.constant 0 : index
    %4 = vector.load %arg4[%c0_6, %c2, %c0_7, %c0_8] : memref<1x4x2x128xf32, #tpu.memory_space<vmem>>, vector<1x1x2x128xf32>
    %5 = vector.shape_cast %4 : vector<1x1x2x128xf32> to vector<2x128xf32>
    %c0_9 = arith.constant 0 : index
    %c3 = arith.constant 3 : index
    %c0_10 = arith.constant 0 : index
    %c0_11 = arith.constant 0 : index
    %6 = vector.load %arg4[%c0_9, %c3, %c0_10, %c0_11] : memref<1x4x2x128xf32, #tpu.memory_space<vmem>>, vector<1x1x2x128xf32>
    %7 = vector.shape_cast %6 : vector<1x1x2x128xf32> to vector<2x128xf32>
    %c0_12 = arith.constant 0 : index
    %c0_13 = arith.constant 0 : index
    %8 = memref.load %arg2[%c0_12, %c0_13] : memref<3x4xf32, #tpu.memory_space<smem>>
    %9 = vector.broadcast %8 : f32 to vector<2x128xf32>
    %10 = arith.mulf %1, %9 : vector<2x128xf32>
    %c0_14 = arith.constant 0 : index
    %c1_15 = arith.constant 1 : index
    %11 = memref.load %arg2[%c0_14, %c1_15] : memref<3x4xf32, #tpu.memory_space<smem>>
    %12 = vector.broadcast %11 : f32 to vector<2x128xf32>
    %13 = arith.mulf %3, %12 : vector<2x128xf32>
    %14 = arith.addf %10, %13 : vector<2x128xf32>
    %c0_16 = arith.constant 0 : index
    %c2_17 = arith.constant 2 : index
    %15 = memref.load %arg2[%c0_16, %c2_17] : memref<3x4xf32, #tpu.memory_space<smem>>
    %16 = vector.broadcast %15 : f32 to vector<2x128xf32>
    %17 = arith.mulf %5, %16 : vector<2x128xf32>
    %18 = arith.addf %14, %17 : vector<2x128xf32>
    %c0_18 = arith.constant 0 : index
    %c3_19 = arith.constant 3 : index
    %19 = memref.load %arg2[%c0_18, %c3_19] : memref<3x4xf32, #tpu.memory_space<smem>>
    %20 = vector.broadcast %19 : f32 to vector<2x128xf32>
    %21 = arith.mulf %7, %20 : vector<2x128xf32>
    %22 = arith.addf %18, %21 : vector<2x128xf32>
    %c0_20 = arith.constant 0 : index
    %23 = memref.load %arg3[%c0_20] : memref<3xf32, #tpu.memory_space<smem>>
    %24 = vector.broadcast %23 : f32 to vector<2x128xf32>
    %25 = arith.addf %22, %24 : vector<2x128xf32>
    %c0_21 = arith.constant 0 : index
    %c0_22 = arith.constant 0 : index
    %c0_23 = arith.constant 0 : index
    %c0_24 = arith.constant 0 : index
    %26 = vector.load %arg5[%c0_21, %c0_22, %c0_23, %c0_24] : memref<1x3x2x128xf32, #tpu.memory_space<vmem>>, vector<1x1x2x128xf32>
    %27 = vector.shape_cast %26 : vector<1x1x2x128xf32> to vector<2x128xf32>
    %28 = vector.shape_cast %25 : vector<2x128xf32> to vector<1x1x2x128xf32>
    tpu.vector_store %arg5[%c0_21, %c0_22, %c0_23, %c0_24], %28 {strides = array<i32>} : memref<1x3x2x128xf32, #tpu.memory_space<vmem>>, vector<1x1x2x128xf32>,
    %c1_25 = arith.constant 1 : index
    %c0_26 = arith.constant 0 : index
    %29 = memref.load %arg2[%c1_25, %c0_26] : memref<3x4xf32, #tpu.memory_space<smem>>
    %30 = vector.broadcast %29 : f32 to vector<2x128xf32>
    %31 = arith.mulf %1, %30 : vector<2x128xf32>
    %c1_27 = arith.constant 1 : index
    %c1_28 = arith.constant 1 : index
    %32 = memref.load %arg2[%c1_27, %c1_28] : memref<3x4xf32, #tpu.memory_space<smem>>
    %33 = vector.broadcast %32 : f32 to vector<2x128xf32>
    %34 = arith.mulf %3, %33 : vector<2x128xf32>
    %35 = arith.addf %31, %34 : vector<2x128xf32>
    %c1_29 = arith.constant 1 : index
    %c2_30 = arith.constant 2 : index
    %36 = memref.load %arg2[%c1_29, %c2_30] : memref<3x4xf32, #tpu.memory_space<smem>>
    %37 = vector.broadcast %36 : f32 to vector<2x128xf32>
    %38 = arith.mulf %5, %37 : vector<2x128xf32>
    %39 = arith.addf %35, %38 : vector<2x128xf32>
    %c1_31 = arith.constant 1 : index
    %c3_32 = arith.constant 3 : index
    %40 = memref.load %arg2[%c1_31, %c3_32] : memref<3x4xf32, #tpu.memory_space<smem>>
    %41 = vector.broadcast %40 : f32 to vector<2x128xf32>
    %42 = arith.mulf %7, %41 : vector<2x128xf32>
    %43 = arith.addf %39, %42 : vector<2x128xf32>
    %c1_33 = arith.constant 1 : index
    %44 = memref.load %arg3[%c1_33] : memref<3xf32, #tpu.memory_space<smem>>
    %45 = vector.broadcast %44 : f32 to vector<2x128xf32>
    %46 = arith.addf %43, %45 : vector<2x128xf32>
    %c0_34 = arith.constant 0 : index
    %c1_35 = arith.constant 1 : index
    %c0_36 = arith.constant 0 : index
    %c0_37 = arith.constant 0 : index
    %47 = vector.load %arg5[%c0_34, %c1_35, %c0_36, %c0_37] : memref<1x3x2x128xf32, #tpu.memory_space<vmem>>, vector<1x1x2x128xf32>
    %48 = vector.shape_cast %47 : vector<1x1x2x128xf32> to vector<2x128xf32>
    %49 = vector.shape_cast %46 : vector<2x128xf32> to vector<1x1x2x128xf32>
    tpu.vector_store %arg5[%c0_34, %c1_35, %c0_36, %c0_37], %49 {strides = array<i32>} : memref<1x3x2x128xf32, #tpu.memory_space<vmem>>, vector<1x1x2x128xf32>,
    %c2_38 = arith.constant 2 : index
    %c0_39 = arith.constant 0 : index
    %50 = memref.load %arg2[%c2_38, %c0_39] : memref<3x4xf32, #tpu.memory_space<smem>>
    %51 = vector.broadcast %50 : f32 to vector<2x128xf32>
    %52 = arith.mulf %1, %51 : vector<2x128xf32>
    %c2_40 = arith.constant 2 : index
    %c1_41 = arith.constant 1 : index
    %53 = memref.load %arg2[%c2_40, %c1_41] : memref<3x4xf32, #tpu.memory_space<smem>>
    %54 = vector.broadcast %53 : f32 to vector<2x128xf32>
    %55 = arith.mulf %3, %54 : vector<2x128xf32>
    %56 = arith.addf %52, %55 : vector<2x128xf32>
    %c2_42 = arith.constant 2 : index
    %c2_43 = arith.constant 2 : index
    %57 = memref.load %arg2[%c2_42, %c2_43] : memref<3x4xf32, #tpu.memory_space<smem>>
    %58 = vector.broadcast %57 : f32 to vector<2x128xf32>
    %59 = arith.mulf %5, %58 : vector<2x128xf32>
    %60 = arith.addf %56, %59 : vector<2x128xf32>
    %c2_44 = arith.constant 2 : index
    %c3_45 = arith.constant 3 : index
    %61 = memref.load %arg2[%c2_44, %c3_45] : memref<3x4xf32, #tpu.memory_space<smem>>
    %62 = vector.broadcast %61 : f32 to vector<2x128xf32>
    %63 = arith.mulf %7, %62 : vector<2x128xf32>
    %64 = arith.addf %60, %63 : vector<2x128xf32>
    %c2_46 = arith.constant 2 : index
    %65 = memref.load %arg3[%c2_46] : memref<3xf32, #tpu.memory_space<smem>>
    %66 = vector.broadcast %65 : f32 to vector<2x128xf32>
    %67 = arith.addf %64, %66 : vector<2x128xf32>
    %c0_47 = arith.constant 0 : index
    %c2_48 = arith.constant 2 : index
    %c0_49 = arith.constant 0 : index
    %c0_50 = arith.constant 0 : index
    %68 = vector.load %arg5[%c0_47, %c2_48, %c0_49, %c0_50] : memref<1x3x2x128xf32, #tpu.memory_space<vmem>>, vector<1x1x2x128xf32>
    %69 = vector.shape_cast %68 : vector<1x1x2x128xf32> to vector<2x128xf32>
    %70 = vector.shape_cast %67 : vector<2x128xf32> to vector<1x1x2x128xf32>
    tpu.vector_store %arg5[%c0_47, %c2_48, %c0_49, %c0_50], %70 {strides = array<i32>} : memref<1x3x2x128xf32, #tpu.memory_space<vmem>>, vector<1x1x2x128xf32>,
    return
  }
  func.func @transform_0(%arg0: i32, %arg1: i32) -> (i32, i32) {
    %c0_i32 = arith.constant 0 : i32
    %c0_i32_0 = arith.constant 0 : i32
    %c0_i32_1 = arith.constant 0 : i32
    return %c0_i32, %c0_i32_0 : i32, i32
  }
  func.func @transform_1(%arg0: i32, %arg1: i32) -> i32 {
    %c0_i32 = arith.constant 0 : i32
    %c0_i32_0 = arith.constant 0 : i32
    return %c0_i32 : i32
  }
  func.func @transform_2(%arg0: i32, %arg1: i32) -> (i32, i32, i32, i32) {
    %c0_i32 = arith.constant 0 : i32
    %c0_i32_0 = arith.constant 0 : i32
    %c0_i32_1 = arith.constant 0 : i32
    return %arg0, %c0_i32, %arg1, %c0_i32_0 : i32, i32, i32, i32
  }
  func.func @transform_3(%arg0: i32, %arg1: i32) -> (i32, i32, i32, i32) {
    %c0_i32 = arith.constant 0 : i32
    %c0_i32_0 = arith.constant 0 : i32
    %c0_i32_1 = arith.constant 0 : i32
    return %arg0, %c0_i32, %arg1, %c0_i32_0 : i32, i32, i32, i32
  }
}

</mosaic_0001>

<llo_original>
// kernel: tpu_custom_call.1
$region0: #{tpu_custom_call.1}
  #allocation0 [shape = 'u32[]', space=smem, size = 0x4, offset = 0x4, fixed_abs, tag = 'smem constant byte address 0x4 - core index']
  #allocation1 [shape = 'u32[72,128]{1,0:T(1,128)}', space=vmem, size = 0x9000, scoped, tag = 'internal scratch']
  %s0 = inlined_call_operand.hbm [shape: f32[3,4], index: 0, kind: input, shape index: {}]
  %s1 = inlined_call_operand.hbm [shape: f32[3], index: 1, kind: input, shape index: {}]
  %s2 = inlined_call_operand.hbm [shape: f32[2,4,2,128], index: 2, kind: input, shape index: {}]
  %s3 = inlined_call_operand.hbm [shape: f32[2,3,2,128], index: 3, kind: output, shape index: {}]
  %s4 = sld [smem:[#allocation0]]
  $region57: #{tpu_custom_call.1} parent=0
    _
  %s6 = ssub.s32 1, %s4
  %s7 = scalar_select 0, %s6, %s4
  $region1: #{tpu_custom_call.1} parent=0
    #allocation2 [shape = 'u8[2048]{0}', space=smem, size = 0x800, scoped, tag = 'input window, operand 0, single buffered']
    #allocation3 [shape = 's32[2]{0}', space=sflag, size = 0x8, scoped, tag = 'scoped memory for tpu_custom_call.1']
    #allocation4 [shape = 's32[2]{0}', space=sflag, size = 0x8, scoped, tag = 'scoped memory for tpu_custom_call.1']
    #allocation5 [shape = 's32[2]{0}', space=sflag, size = 0x8, scoped, tag = 'scoped memory for tpu_custom_call.1']
    #allocation6 [shape = 'u8[512]{0}', space=smem, size = 0x200, scoped, tag = 'input window, operand 1, single buffered']
    #allocation7 [shape = 's32[1]{0}', space=sflag, size = 0x4, scoped, tag = 'scoped memory for tpu_custom_call.1']
    #allocation8 [shape = 'u8[8192]{0}', space=vmem, size = 0x2000, scoped, tag = 'input window, operand 2']
    #allocation9 [shape = 'u8[6144]{0}', space=vmem, size = 0x1800, scoped, tag = 'output window, operand 0']
    %8 = vsyncpa [#allocation5], 0
    %9 = vsyncpa [#allocation7], 0
    %10 = vsyncpa [#allocation3], 0
    %s11 = scalar_lea.sflag [#allocation3], 1
    %12 = vsyncpa %s11, 0
    %13 = vsyncpa [#allocation4], 0
    %s14 = scalar_lea.sflag [#allocation4], 1
    %15 = vsyncpa %s14, 0
    loop: start=0, step=1, limit=4
    $region2: #{tpu_custom_call.1} parent=1 // loop_pre_header
      _
    $region3: #{tpu_custom_call.1} parent=1 // loop_header
      %s17 = sphi 0, %s21
      %p18 = scmp.ge.s32.totalorder %s17, 4
      %s24 = sphi 0, %s36
      %s25 = sphi 0, %s32
      %s26 = sphi 0, %s24
      %s27 = sphi 0, %s25
      %s28 = sphi 0, %s26
      %s29 = sphi 0, %s27
      %s37 = sphi 0, %s37
      %s39 = sphi 0, %s37
      %s40 = sphi 0, %s39
      %s54 = sphi 0, %s40
      %s58 = sphi 0, %s58
      %s60 = sphi 0, %s58
      %s61 = sphi 0, %s60
      %s75 = sphi 0, %s61
      %s83 = sphi 0, %s85
      %s86 = sphi 0, %s83
      %s87 = sphi 0, %s86
      %s103 = sphi 0, %s87
      %s111 = sphi 0, %s113
      %s114 = sphi 0, %s111
      %s115 = sphi 0, %s114
      %s131 = sphi 0, %s115
    $region4: #{tpu_custom_call.1} parent=1 // loop_header_branch
      %20 = sbr.rel (%p18) target = $region8
    $region5: #{tpu_custom_call.1} parent=1 // loop_body
      %s22 = ssub.s32 %s17, 1
      %s23 = ssub.s32 %s17, 2
      %s30 = sadd.s32 1, %s25
      %p31 = scmp.ge.s32.totalorder %s30, 1
      %s32 = scalar_select %p31, 0, %s30
      %s33 = sadd.s32 1, %s24
      %s34 = scalar_select %p31, %s33, %s24
      %p35 = scmp.ge.s32.totalorder %s34, 2
      %s36 = scalar_select %p35, 0, %s34
      %s38 = sadd.s32 %s37, 1
      %p41 = scmp.eq.s32.totalorder %s17, 1
      %p42 = scmp.ne.s32.totalorder %s37, %s39
      %p43 = scmp.eq.s32.totalorder %s17, 0
      %p44 = por %p42, %p43
      %p45 = scmp.ne.s32.totalorder %s37, %s39
      %p46 = scmp.eq.s32.totalorder %s22, 1
      %p47 = por %p45, %p46
      %p48 = scmp.ne.s32.totalorder %s39, %s40
      %p49 = scmp.eq.s32.totalorder %s22, 0
      %p50 = por %p48, %p49
      %p51 = scmp.ne.s32.totalorder %s39, %s40
      %p52 = scmp.eq.s32.totalorder %s23, 1
      %p53 = por %p51, %p52
      %p55 = scmp.ne.s32.totalorder %s40, %s54
      %p56 = scmp.eq.s32.totalorder %s23, 0
      %p57 = por %p55, %p56
      %s59 = sadd.s32 %s58, 1
      %p62 = scmp.eq.s32.totalorder %s17, 1
      %p63 = scmp.ne.s32.totalorder %s58, %s60
      %p64 = scmp.eq.s32.totalorder %s17, 0
      %p65 = por %p63, %p64
      %p66 = scmp.ne.s32.totalorder %s58, %s60
      %p67 = scmp.eq.s32.totalorder %s22, 1
      %p68 = por %p66, %p67
      %p69 = scmp.ne.s32.totalorder %s60, %s61
      %p70 = scmp.eq.s32.totalorder %s22, 0
      %p71 = por %p69, %p70
      %p72 = scmp.ne.s32.totalorder %s60, %s61
      %p73 = scmp.eq.s32.totalorder %s23, 1
      %p74 = por %p72, %p73
      %p76 = scmp.ne.s32.totalorder %s61, %s75
      %p77 = scmp.eq.s32.totalorder %s23, 0
      %p78 = por %p76, %p77
      %s79 = ssub.s32 %s24, %s36
      %s80 = ssub.s32 %s25, %s32
      %s81 = sor.u32 %s79, %s80
      %p82 = scmp.eq.s32.totalorder %s81, 0
      %s84 = sadd.s32 %s83, 1
      %s85 = scalar_select %p82, %s83, %s84
      %p88 = pneg %p82
      %p89 = scmp.eq.s32.totalorder %s17, 1
      %p90 = por %p88, %p89
      %p91 = scmp.ne.s32.totalorder %s83, %s86
      %p92 = scmp.eq.s32.totalorder %s17, 0
      %p93 = por %p91, %p92
      %p94 = scmp.ne.s32.totalorder %s83, %s86
      %p95 = scmp.eq.s32.totalorder %s22, 1
      %p96 = por %p94, %p95
      %p97 = scmp.ne.s32.totalorder %s86, %s87
      %p98 = scmp.eq.s32.totalorder %s22, 0
      %p99 = por %p97, %p98
      %p100 = scmp.ne.s32.totalorder %s86, %s87
      %p101 = scmp.eq.s32.totalorder %s23, 1
      %p102 = por %p100, %p101
      %p104 = scmp.ne.s32.totalorder %s87, %s103
      %p105 = scmp.eq.s32.totalorder %s23, 0
      %p106 = por %p104, %p105
      %s107 = ssub.s32 %s24, %s36
      %s108 = ssub.s32 %s25, %s32
      %s109 = sor.u32 %s107, %s108
      %p110 = scmp.eq.s32.totalorder %s109, 0
      %s112 = sadd.s32 %s111, 1
      %s113 = scalar_select %p110, %s111, %s112
      %p116 = pneg %p110
      %p117 = scmp.eq.s32.totalorder %s17, 1
      %p118 = por %p116, %p117
      %p119 = scmp.ne.s32.totalorder %s111, %s114
      %p120 = scmp.eq.s32.totalorder %s17, 0
      %p121 = por %p119, %p120
      %p122 = scmp.ne.s32.totalorder %s111, %s114
      %p123 = scmp.eq.s32.totalorder %s22, 1
      %p124 = por %p122, %p123
      %p125 = scmp.ne.s32.totalorder %s114, %s115
      %p126 = scmp.eq.s32.totalorder %s22, 0
      %p127 = por %p125, %p126
      %p128 = scmp.ne.s32.totalorder %s114, %s115
      %p129 = scmp.eq.s32.totalorder %s23, 1
      %p130 = por %p128, %p129
      %p132 = scmp.ne.s32.totalorder %s115, %s131
      %p133 = scmp.eq.s32.totalorder %s23, 0
      %p134 = por %p132, %p133
      %p135 = scmp.le.s32.totalorder 1, %s17
      %p136 = scmp.lt.s32.totalorder %s17, 3
      %p137 = pnand %p135, %p136
      %p138 = pneg %p137
      // Predicated region
      $region9: #{tpu_custom_call.1} parent=5 // pred_check
        _
      $region10: #{tpu_custom_call.1} parent=5 // pred_check_branch
        %140 = sbr.rel (%p137) target = $region12
      $region11: #{tpu_custom_call.1} parent=5 // pred_region
        %s141 = ssub.s32 %s17, 1
        // Predicated region
        $region13: #{tpu_custom_call.1} parent=11 // pred_check
          %p142 = pneg %p50
        $region14: #{tpu_custom_call.1} parent=11 // pred_check_branch
          %144 = sbr.rel (%p142) target = $region16
        $region15: #{tpu_custom_call.1} parent=11 // pred_region
          %146 = vsyncadd [#allocation5], 0
          %s148 = sshll.u32 %s0, 4
          %s149 = int_to_ptr.hbm [resolvable:$true] %s148
          %151 = dma.hbm_to_smem %s149, 64, [#allocation2], [#allocation5]
        $region16: #{tpu_custom_call.1} parent=11 // pred_fallthru
          _
        // Predicated region
        $region17: #{tpu_custom_call.1} parent=11 // pred_check
          %p152 = pneg %p71
        $region18: #{tpu_custom_call.1} parent=11 // pred_check_branch
          %154 = sbr.rel (%p152) target = $region20
        $region19: #{tpu_custom_call.1} parent=11 // pred_region
          %156 = vsyncadd [#allocation7], 0
          %s158 = sshll.u32 %s1, 4
          %s159 = int_to_ptr.hbm [resolvable:$true] %s158
          %161 = dma.hbm_to_smem %s159, 16, [#allocation6], [#allocation7]
        $region20: #{tpu_custom_call.1} parent=11 // pred_fallthru
          _
      $region12: #{tpu_custom_call.1} parent=5 // pred_fallthru
        _
      %p162 = scmp.lt.s32.totalorder %s17, 2
      // Predicated region
      $region21: #{tpu_custom_call.1} parent=5 // pred_check
        %p163 = pneg %p162
      $region22: #{tpu_custom_call.1} parent=5 // pred_check_branch
        %165 = sbr.rel (%p163) target = $region24
      $region23: #{tpu_custom_call.1} parent=5 // pred_region
        // Predicated region
        $region25: #{tpu_custom_call.1} parent=23 // pred_check
          %p166 = pneg %p93
        $region26: #{tpu_custom_call.1} parent=23 // pred_check_branch
          %168 = sbr.rel (%p166) target = $region28
        $region27: #{tpu_custom_call.1} parent=23 // pred_region
          %s169 = sand.u32 %s83, 1
          %s170 = scalar_lea.sflag [#allocation3], %s169
          %s171 = sand.u32 %s83, 1
          %s172 = smul.addr %s171, 8
          %s173 = scalar_lea.vmem [#allocation8], %s172
          %175 = vsyncadd %s170, 0
          %s176 = smul.addr %s24, 4
          %s177 = sadd.s32 %s25, %s176
          %s178 = smul.addr %s177, 2
          %s179 = scalar_lea.hbm %s2, %s178
          %s180 = sshll.u32 %s179, 4
          %s181 = int_to_ptr.hbm [resolvable:$true] %s180
          %s182 = sshll.u32 %s173, 4
          %s183 = int_to_ptr.vmem [resolvable:$true] %s182
          %188 = dma.hbm_to_vmem [thread:$0]  %s181, 128, %s183, %s170, 32, 32, 2
        $region28: #{tpu_custom_call.1} parent=23 // pred_fallthru
          _
      $region24: #{tpu_custom_call.1} parent=5 // pred_fallthru
        _
      %p189 = scmp.le.s32.totalorder 1, %s17
      %p190 = scmp.lt.s32.totalorder %s17, 3
      %p191 = pnand %p189, %p190
      %p192 = pneg %p191
      // Predicated region
      $region29: #{tpu_custom_call.1} parent=5 // pred_check
        _
      $region30: #{tpu_custom_call.1} parent=5 // pred_check_branch
        %194 = sbr.rel (%p191) target = $region32
      $region31: #{tpu_custom_call.1} parent=5 // pred_region
        %s195 = ssub.s32 %s17, 1
        // Predicated region
        $region33: #{tpu_custom_call.1} parent=31 // pred_check
          %p196 = pneg %p50
        $region34: #{tpu_custom_call.1} parent=31 // pred_check_branch
          %198 = sbr.rel (%p196) target = $region36
        $region35: #{tpu_custom_call.1} parent=31 // pred_region
          %200 = dma.done [#allocation5], 64
        $region36: #{tpu_custom_call.1} parent=31 // pred_fallthru
          _
        // Predicated region
        $region37: #{tpu_custom_call.1} parent=31 // pred_check
          %p201 = pneg %p71
        $region38: #{tpu_custom_call.1} parent=31 // pred_check_branch
          %203 = sbr.rel (%p201) target = $region40
        $region39: #{tpu_custom_call.1} parent=31 // pred_region
          %205 = dma.done [#allocation7], 16
        $region40: #{tpu_custom_call.1} parent=31 // pred_fallthru
          _
        %s206 = sand.u32 %s86, 1
        %s207 = scalar_lea.sflag [#allocation3], %s206
        %s208 = sand.u32 %s86, 1
        %s209 = smul.addr %s208, 8
        %s210 = scalar_lea.vmem [#allocation8], %s209
        // Predicated region
        $region41: #{tpu_custom_call.1} parent=31 // pred_check
          %p211 = pneg %p99
        $region42: #{tpu_custom_call.1} parent=31 // pred_check_branch
          %213 = sbr.rel (%p211) target = $region44
        $region43: #{tpu_custom_call.1} parent=31 // pred_region
          %215 = dma.done %s207, 128
        $region44: #{tpu_custom_call.1} parent=31 // pred_fallthru
          _
        %216 = sfence
        %p217 = pneg %p50
        %p218 = pneg %p47
        %p219 = pneg %p71
        %p220 = pneg %p68
        %s221 = sand.u32 %s86, 1
        %s222 = scalar_lea.sflag [#allocation3], %s221
        %s223 = sand.u32 %s86, 1
        %s224 = smul.addr %s223, 8
        %s225 = scalar_lea.vmem [#allocation8], %s224
        %p226 = pneg %p99
        %p227 = pneg %p96
        %p228 = pneg %p127
        %p229 = pneg %p124
        %s230 = sand.u32 %s114, 1
        %s231 = scalar_lea.sflag [#allocation4], %s230
        %s232 = sand.u32 %s114, 1
        %s233 = smul.addr %s232, 6
        %s234 = scalar_lea.vmem [#allocation9], %s233
        %v235 = vld [vmem:[%s210] sm:$0x3]
        %s236 = scalar_lea.vmem %s210, 2 [#allocation8]
        %v237 = vld [vmem:[%s236] sm:$0x3]
        %s238 = scalar_lea.vmem %s210, 4 [#allocation8]
        %v239 = vld [vmem:[%s238] sm:$0x3]
        %s240 = scalar_lea.vmem %s210, 6 [#allocation8]
        %v241 = vld [vmem:[%s240] sm:$0x3]
        %s242 = sld [smem:[#allocation2]]
        %v243 = vstv %s242
        %v244 = vmul.f32 %v235, %v243
        %s245 = sld [smem:[#allocation2 + $0x1]]
        %v246 = vstv %s245
        %v247 = vmul.f32 %v237, %v246
        %v248 = vadd.f32 %v244, %v247
        %s249 = sld [smem:[#allocation2 + $0x2]]
        %v250 = vstv %s249
        %v251 = vmul.f32 %v239, %v250
        %v252 = vadd.f32 %v248, %v251
        %s253 = sld [smem:[#allocation2 + $0x3]]
        %v254 = vstv %s253
        %v255 = vmul.f32 %v241, %v254
        %v256 = vadd.f32 %v252, %v255
        %s257 = sld [smem:[#allocation6]]
        %v258 = vstv %s257
        %v259 = vadd.f32 %v256, %v258
        %260 = vst [vmem:[%s234] sm:$0x3] %v259
        %s261 = sld [smem:[#allocation2 + $0x80]]
        %v262 = vstv %s261
        %v263 = vmul.f32 %v235, %v262
        %s264 = sld [smem:[#allocation2 + $0x81]]
        %v265 = vstv %s264
        %v266 = vmul.f32 %v237, %v265
        %v267 = vadd.f32 %v263, %v266
        %s268 = sld [smem:[#allocation2 + $0x82]]
        %v269 = vstv %s268
        %v270 = vmul.f32 %v239, %v269
        %v271 = vadd.f32 %v267, %v270
        %s272 = sld [smem:[#allocation2 + $0x83]]
        %v273 = vstv %s272
        %v274 = vmul.f32 %v241, %v273
        %v275 = vadd.f32 %v271, %v274
        %s276 = sld [smem:[#allocation6 + $0x1]]
        %v277 = vstv %s276
        %v278 = vadd.f32 %v275, %v277
        %s279 = scalar_lea.vmem %s234, 2 [#allocation9]
        %280 = vst [vmem:[%s279] sm:$0x3] %v278
        %s281 = sld [smem:[#allocation2 + $0x100]]
        %v282 = vstv %s281
        %v283 = vmul.f32 %v235, %v282
        %s284 = sld [smem:[#allocation2 + $0x101]]
        %v285 = vstv %s284
        %v286 = vmul.f32 %v237, %v285
        %v287 = vadd.f32 %v283, %v286
        %s288 = sld [smem:[#allocation2 + $0x102]]
        %v289 = vstv %s288
        %v290 = vmul.f32 %v239, %v289
        %v291 = vadd.f32 %v287, %v290
        %s292 = sld [smem:[#allocation2 + $0x103]]
        %v293 = vstv %s292
        %v294 = vmul.f32 %v241, %v293
        %v295 = vadd.f32 %v291, %v294
        %s296 = sld [smem:[#allocation6 + $0x2]]
        %v297 = vstv %s296
        %v298 = vadd.f32 %v295, %v297
        %s299 = scalar_lea.vmem %s234, 4 [#allocation9]
        %300 = vst [vmem:[%s299] sm:$0x3] %v298
        %s301 = sand.u32 %s114, 1
        %s302 = scalar_lea.sflag [#allocation4], %s301
        %s303 = sand.u32 %s114, 1
        %s304 = smul.addr %s303, 6
        %s305 = scalar_lea.vmem [#allocation9], %s304
        // Predicated region
        $region45: #{tpu_custom_call.1} parent=31 // pred_check
          %p306 = pneg %p124
        $region46: #{tpu_custom_call.1} parent=31 // pred_check_branch
          %308 = sbr.rel (%p306) target = $region48
        $region47: #{tpu_custom_call.1} parent=31 // pred_region
          %310 = vsyncadd %s302, 0
          %s311 = smul.addr %s26, 3
          %s312 = sadd.s32 %s27, %s311
          %s313 = smul.addr %s312, 2
          %s314 = scalar_lea.hbm %s3, %s313
          %s315 = sshll.u32 %s305, 4
          %s316 = int_to_ptr.vmem [resolvable:$true] %s315
          %s317 = sshll.u32 %s314, 4
          %s318 = int_to_ptr.hbm [resolvable:$true] %s317
          %323 = dma.vmem_to_hbm [thread:$0]  %s316, 96, %s318, %s302, 32, 32, 2
        $region48: #{tpu_custom_call.1} parent=31 // pred_fallthru
          _
      $region32: #{tpu_custom_call.1} parent=5 // pred_fallthru
        _
      %p324 = scmp.le.s32.totalorder 2, %s17
      // Predicated region
      $region49: #{tpu_custom_call.1} parent=5 // pred_check
        %p325 = pneg %p324
      $region50: #{tpu_custom_call.1} parent=5 // pred_check_branch
        %327 = sbr.rel (%p325) target = $region52
      $region51: #{tpu_custom_call.1} parent=5 // pred_region
        %s328 = ssub.s32 %s17, 2
        // Predicated region
        $region53: #{tpu_custom_call.1} parent=51 // pred_check
          %p329 = pneg %p130
        $region54: #{tpu_custom_call.1} parent=51 // pred_check_branch
          %331 = sbr.rel (%p329) target = $region56
        $region55: #{tpu_custom_call.1} parent=51 // pred_region
          %s332 = sand.u32 %s115, 1
          %s333 = scalar_lea.sflag [#allocation4], %s332
          %s334 = sand.u32 %s115, 1
          %s335 = smul.addr %s334, 6
          %s336 = scalar_lea.vmem [#allocation9], %s335
          %338 = dma.done %s333, 96
        $region56: #{tpu_custom_call.1} parent=51 // pred_fallthru
          _
      $region52: #{tpu_custom_call.1} parent=5 // pred_fallthru
        _
    $region6: #{tpu_custom_call.1} parent=1 // loop_footer
      %s21 = sadd.s32 1, %s17
    $region7: #{tpu_custom_call.1} parent=1 // loop_footer_branch
      %16 = sbr.rel target = $region3
    $region8: #{tpu_custom_call.1} parent=1 // loop_exit
      _
    %339 = vsyncpa [#allocation3], 1
    %s340 = scalar_lea.sflag [#allocation3], 1
    %341 = vsyncpa %s340, 1
    %342 = vsyncpa [#allocation4], 1
    %s343 = scalar_lea.sflag [#allocation4], 1
    %344 = vsyncpa %s343, 1
    %345 = vsyncpa [#allocation5], 1
    %s346 = scalar_lea.sflag [#allocation5], 1
    %347 = vsyncpa %s346, 1
    %348 = vsyncpa [#allocation7], 1

</llo_original>
